<compile_context>
chip_gen: v5e
topology: v5e:2x2
jax: 0.10.0
libtpu: 0.0.40
codegen_flags: <defaults>
</compile_context>

<pallas_src>
import math

import jax
import jax.numpy as jnp
import numpy as np
from jax.experimental import pallas as pl
from jax.experimental.pallas import tpu as pltpu


def _round_up(x, m):
    return (x + m - 1) // m * m


def _vmem_budget_bytes():
    """Per-generation scoped-VMEM budget with headroom below physical."""
    cap = 64 * 1024 * 1024
    try:
        info = pltpu.get_tpu_info()
        cap = int(getattr(info, "vmem_capacity_bytes", cap) or cap)
    except Exception:
        pass
    return int(min(max(cap - 16 * 1024 * 1024, 32 * 1024 * 1024),
                   96 * 1024 * 1024))


def _select_tiles(num_nodes, fin_pad, fout_pad, project_first, vmem_budget):
    """Pick (tm, tk): dst tile as large as possible (streamed src operand is
    re-read once per dst tile), tk second; tm capped so >=2 dst tiles exist
    when possible (v7x megacore) and the pipelined footprint fits VMEM."""
    npad0 = _round_up(num_nodes, 128)
    d_src = fout_pad if project_first else fin_pad     # streamed src operand width
    d_acc = fout_pad if project_first else fin_pad     # accumulator width
    tm_cap = npad0 if npad0 < 256 else max(128, (npad0 // 2) // 128 * 128)
    for tm in (1024, 512, 256, 128):
        if tm > tm_cap:
            continue
        for tk in (512, 256, 128):
            if tk > npad0:
                continue
            fp = (2 * tm * tk * 2               # A tile (bf16, double-buffered)
                  + 2 * tk * d_src * 2          # streamed src operand (bf16)
                  + 2 * tm * fout_pad * 4       # root tile (f32)
                  + tm * d_acc * 4              # f32 accumulator
                  + 2 * tm * fout_pad * 4)      # output tile (f32)
            if not project_first:
                fp += 2 * fin_pad * fout_pad * 2  # resident W (bf16)
            if fp <= 0.7 * vmem_budget:
                return tm, tk
    return 128, 128


def _agg_then_project_kernel(nz_ref, kmap_ref, a_ref, fsrc_ref, root_ref,
                             w_ref, out_ref, acc_ref):
    """in_feats <= out_feats.  Grid = (dst_tiles, src_tiles); src axis last.

    nz_ref/kmap_ref : [gi, gk] i32 SMEM  block-nonempty flag / block-index map
    a_ref           : [tm, tk]            bf16  A[dst_tile, kmap[i,k]]
    fsrc_ref        : [tk, Fin_pad]       bf16  pre-scaled (feat*norm) src rows
    root_ref        : [tm, Fout_pad]      f32   feat @ W + bias, dst rows
    w_ref           : [Fin_pad, Fout_pad] bf16  resident weight
    out_ref         : [tm, Fout_pad]      f32
    acc_ref         : [tm, Fin_pad]       f32   VMEM accumulator for A @ feat_n
    """
    i = pl.program_id(0)
    k = pl.program_id(1)

    @pl.when(k == 0)
    def _():
        acc_ref[...] = jnp.zeros_like(acc_ref)

    @pl.when(nz_ref[i, k] > 0)          # skip empty adjacency blocks
    def _():
        acc_ref[...] += jnp.dot(a_ref[...], fsrc_ref[...],
                                preferred_element_type=jnp.float32)

    @pl.when(k == pl.num_programs(1) - 1)
    def _():
        out_ref[...] = (jnp.dot(acc_ref[...].astype(jnp.bfloat16), w_ref[...],
                                preferred_element_type=jnp.float32)
                        + root_ref[...])


def _project_first_kernel(nz_ref, kmap_ref, a_ref, hsrc_ref, root_ref, out_ref):
    """in_feats > out_feats: H = feat_n @ W precomputed, accumulate in Fout
    space directly into the resident f32 output tile."""
    i = pl.program_id(0)
    k = pl.program_id(1)

    @pl.when(k == 0)
    def _():
        out_ref[...] = root_ref[...]

    @pl.when(nz_ref[i, k] > 0)          # skip empty adjacency blocks
    def _():
        out_ref[...] += jnp.dot(a_ref[...], hsrc_ref[...],
                                preferred_element_type=jnp.float32)


def resage_conv_forward(src, dst, e_feat, feat, edge_weight, weight, bias,
                        alpha, num_nodes, *, tile_m=None, tile_k=None):
    """RESAGEConv.forward (eval mode: dropout = identity, activation = None).

    src, dst : [E] int32 edge endpoints (edge src -> dst)
    e_feat   : [E] int32 edge types in [1, num_etypes]
    feat     : [num_nodes, in_feats] float32 node features
    """
    n, in_feats = feat.shape
    out_feats = weight.shape[1]
    assert n == num_nodes

    # ---- tiny parameter path + graph glue (plain JAX) -----------------------
    # TODO(synk): feat_dropout is identity here (inference / p=0.0); stochastic
    # dropout would need pltpu.prng_* inside the kernel.
    ew_param = jax.nn.leaky_relu(edge_weight * alpha, negative_slope=0.01)
    ew = ew_param[e_feat - 1, 0]                                    # [E]

    # Prefer multiples of 256 for production widths (2x256^2 MXU on v6e/v7x);
    # 128 here keeps dead work minimal at small demo widths.
    fin_pad = _round_up(in_feats, 128)
    fout_pad = _round_up(out_feats, 128)
    project_first = in_feats > out_feats

    vmem_budget = _vmem_budget_bytes()
    tm, tk = _select_tiles(num_nodes, fin_pad, fout_pad, project_first,
                           vmem_budget)
    if tile_m is not None:
        tm = tile_m
    if tile_k is not None:
        tk = tile_k
    npad = _round_up(num_nodes, (tm * tk) // math.gcd(tm, tk))
    gi, gk = npad // tm, npad // tk

    # Dense edge-weighted adjacency A[dst, src] as a bf16 MXU operand.
    # TODO(synk): for large sparse graphs replace the dense O(N^2) adjacency
    # with a CSR-style scalar-prefetch row gather; the block-nonempty skip
    # below is the dense-layout stopgap.
    A = (jnp.zeros((npad, npad), jnp.float32)
         .at[dst, src].add(ew)).astype(jnp.bfloat16)

    # Per-node weighted in-degree / norm: O(E) segment-sum in the wrapper.
    deg = jnp.zeros((npad,), jnp.float32).at[dst].add(ew)
    norm = (1.0 / jnp.maximum(deg, 1.0))[:, None]                   # [npad, 1]

    feat_p = jnp.zeros((npad, fin_pad), jnp.float32).at[:n, :in_feats].set(feat)
    w_p = (jnp.zeros((fin_pad, fout_pad), jnp.float32)
           .at[:in_feats, :out_feats].set(weight))
    b_p = jnp.zeros((fout_pad,), jnp.float32).at[:out_feats].set(bias)

    # Pre-scale + pre-cast ONCE (reused gi times by the kernel).
    feat_n = feat_p * norm                                          # f32
    # Root term feat @ W + bias kept in f32 (matches the module's feat_root).
    root = feat_p @ w_p + b_p[None, :]                              # [npad, Fout_pad]

    # Block-sparsity metadata, scalar-prefetched into SMEM:
    #   nz[i,k]   = 1 iff adjacency block (i,k) has any edge
    #   kmap[i,k] = k if nonempty else the last nonempty k' <= k (else 0), so
    #               empty blocks re-use the previous block index -> no new DMA.
    counts = (jnp.zeros((gi, gk), jnp.int32)
              .at[dst // tm, src // tk].add(jnp.ones_like(src)))
    nz = (counts > 0).astype(jnp.int32)
    karange = jax.lax.broadcasted_iota(jnp.int32, (gi, gk), 1)
    kmap = jnp.maximum(
        jax.lax.cummax(jnp.where(nz > 0, karange, -1), axis=1), 0
    ).astype(jnp.int32)

    if project_first:
        hsrc = (feat_n @ w_p).astype(jnp.bfloat16)                  # [npad, Fout_pad]
        kernel = _project_first_kernel
        in_specs = [
            pl.BlockSpec((tm, tk), lambda i, k, nzr, kmr: (i, kmr[i, k])),        # A
            pl.BlockSpec((tk, fout_pad), lambda i, k, nzr, kmr: (kmr[i, k], 0)),  # H
            pl.BlockSpec((tm, fout_pad), lambda i, k, nzr, kmr: (i, 0)),          # root
        ]
        operands = (nz, kmap, A, hsrc, root)
        scratch = []
    else:
        fsrc = feat_n.astype(jnp.bfloat16)                          # [npad, Fin_pad]
        w_bf = w_p.astype(jnp.bfloat16)
        kernel = _agg_then_project_kernel
        in_specs = [
            pl.BlockSpec((tm, tk), lambda i, k, nzr, kmr: (i, kmr[i, k])),        # A
            pl.BlockSpec((tk, fin_pad), lambda i, k, nzr, kmr: (kmr[i, k], 0)),   # feat_n
            pl.BlockSpec((tm, fout_pad), lambda i, k, nzr, kmr: (i, 0)),          # root
            pl.BlockSpec((fin_pad, fout_pad), lambda i, k, nzr, kmr: (0, 0)),     # W
        ]
        operands = (nz, kmap, A, fsrc, root, w_bf)
        scratch = [pltpu.VMEM((tm, fin_pad), jnp.float32)]

    out = pl.pallas_call(
        kernel,
        out_shape=jax.ShapeDtypeStruct((npad, fout_pad), jnp.float32),
        grid_spec=pltpu.PrefetchScalarGridSpec(
            num_scalar_prefetch=2,
            grid=(gi, gk),
            in_specs=in_specs,
            out_specs=pl.BlockSpec((tm, fout_pad),
                                   lambda i, k, nzr, kmr: (i, 0)),
            scratch_shapes=scratch,
        ),
        compiler_params=pltpu.CompilerParams(
            dimension_semantics=("parallel", "arbitrary"),
            vmem_limit_bytes=vmem_budget,
        ),
    )(*operands)

    return out[:num_nodes, :out_feats]


def _reference_f32(src, dst, e_feat, feat, edge_weight, weight, bias, alpha,
                   num_nodes):
    """Pure-f32 mirror of the PyTorch forward (including its branch structure)."""
    ew_param = jax.nn.leaky_relu(edge_weight * alpha, negative_slope=0.01)
    ew = ew_param[e_feat - 1, 0]
    A = jnp.zeros((num_nodes, num_nodes), jnp.float32).at[dst, src].add(ew)
    feat_root = feat @ weight
    deg = jnp.sum(A, axis=-1, keepdims=True)
    norm = 1.0 / jnp.maximum(deg, 1.0)
    feat_n = feat * norm
    in_feats, out_feats = weight.shape
    if in_feats > out_feats:
        rst = A @ (feat_n @ weight)
    else:
        rst = (A @ feat_n) @ weight
    return rst + feat_root + bias[None, :]


def _reference_mixed(src, dst, e_feat, feat, edge_weight, weight, bias, alpha,
                     num_nodes):
    """Same algebra / mixed precision as the kernel, in plain JAX."""
    ew_param = jax.nn.leaky_relu(edge_weight * alpha, negative_slope=0.01)
    ew = ew_param[e_feat - 1, 0]
    A = jnp.zeros((num_nodes, num_nodes), jnp.float32).at[dst, src].add(ew)
    deg = jnp.zeros((num_nodes,), jnp.float32).at[dst].add(ew)
    norm = (1.0 / jnp.maximum(deg, 1.0))[:, None]
    feat_n = feat * norm
    root = feat @ weight + bias[None, :]
    in_feats, out_feats = weight.shape
    a16 = A.astype(jnp.bfloat16)
    if in_feats > out_feats:
        h = (feat_n @ weight).astype(jnp.bfloat16)
        agg = jnp.dot(a16, h, preferred_element_type=jnp.float32)
        return agg + root
    agg = jnp.dot(a16, feat_n.astype(jnp.bfloat16),
                  preferred_element_type=jnp.float32)
    return jnp.dot(agg.astype(jnp.bfloat16), weight.astype(jnp.bfloat16),
                   preferred_element_type=jnp.float32) + root


if __name__ == "__main__":
    key = jax.random.PRNGKey(0)

    N = 192           # nodes (padded to 256 inside the wrapper -> 2x2 grid)
    E = 600           # edges
    NUM_ETYPES = 3
    ALPHA = 2.0       # scaling_factor

    # Two configs exercise both branches: in_feats<=out_feats (agg-then-project
    # kernel) and in_feats>out_feats (project-first kernel).
    for cfg, (IN_FEATS, OUT_FEATS) in enumerate([(16, 32), (64, 32)]):
        k_feat, k_w, k_ew, k_src, k_dst, k_et, key = jax.random.split(key, 7)

        feat = jax.random.normal(k_feat, (N, IN_FEATS), jnp.float32)
        limit = float(np.sqrt(6.0 / (IN_FEATS + OUT_FEATS)))
        weight = jax.random.uniform(k_w, (IN_FEATS, OUT_FEATS), jnp.float32,
                                    -limit, limit)
        bias = jnp.zeros((OUT_FEATS,), jnp.float32)
        edge_weight = jax.random.normal(k_ew, (NUM_ETYPES, 1), jnp.float32)

        # First config restricts src ids to [0, 96) so that (with tile_k=128)
        # the second src block of every dst tile is empty -> exercises the
        # block-skip (kmap / pl.when) path; second config uses the full range.
        src_hi = 96 if cfg == 0 else N
        src = jax.random.randint(k_src, (E,), 0, src_hi, jnp.int32)
        dst = jax.random.randint(k_dst, (E,), 0, N, jnp.int32)
        e_feat = jax.random.randint(k_et, (E,), 1, NUM_ETYPES + 1, jnp.int32)

        # Small explicit tiles so the 2x2 grid / accumulation / skip paths are
        # exercised at toy sizes; leave tile_m/tile_k=None for real graphs.
        out = resage_conv_forward(src, dst, e_feat, feat, edge_weight, weight,
                                  bias, ALPHA, N, tile_m=128, tile_k=128)
        out = jax.block_until_ready(out)
        out_np = np.asarray(out)

        # Tight check against a reference using the same algebra / mixed
        # precision as the kernel.
        ref_mixed = _reference_mixed(src, dst, e_feat, feat, edge_weight,
                                     weight, bias, ALPHA, N)
        np.testing.assert_allclose(out_np, np.asarray(ref_mixed),
                                   rtol=2e-2, atol=2e-2)

        # Loose sanity check against the pure-f32 PyTorch-mirroring reference
        # (tolerance dominated by the bf16 MXU operands).
        ref32 = _reference_f32(src, dst, e_feat, feat, edge_weight, weight,
                               bias, ALPHA, N)
        np.testing.assert_allclose(out_np, np.asarray(ref32),
                                   rtol=5e-2, atol=1e-1)

    print("KERNEL_OK")
</pallas_src>

<mosaic_0001>
module attributes {stable_mosaic.version = 11 : i64} {
  func.func @_agg_then_project_kernel(%arg0: i32, %arg1: i32, %arg2: memref<2x2xi32, #tpu.memory_space<smem>>, %arg3: memref<2x2xi32, #tpu.memory_space<smem>>, %arg4: memref<128x128xbf16, #tpu.memory_space<vmem>>, %arg5: memref<128x128xbf16, #tpu.memory_space<vmem>>, %arg6: memref<128x128xf32, #tpu.memory_space<vmem>>, %arg7: memref<128x128xbf16, #tpu.memory_space<vmem>>, %arg8: memref<128x128xf32, #tpu.memory_space<vmem>>, %arg9: memref<128x128xf32, #tpu.memory_space<vmem>>) attributes {dimension_semantics = [#tpu.dimension_semantics<parallel>, #tpu.dimension_semantics<arbitrary>], iteration_bounds = array<i64: 2, 2>, scalar_prefetch = 2 : i64, scratch_operands = 1 : i64, tpu.core_type = #tpu.core_type<tc>, window_params = [{transform_indices = @transform_0, window_bounds = array<i64: 128, 128>}, {transform_indices = @transform_1, window_bounds = array<i64: 128, 128>}, {transform_indices = @transform_2, window_bounds = array<i64: 128, 128>}, {pipeline_mode = #tpu.pipeline_mode<synchronous>, transform_indices = @transform_3, window_bounds = array<i64: 128, 128>}, {transform_indices = @transform_4, window_bounds = array<i64: 128, 128>}]} {
    %c0_i32 = arith.constant 0 : i32
    %0 = arith.cmpi eq, %arg1, %c0_i32 : i32
    %1 = arith.extui %0 : i1 to i32
    %c0_i32_0 = arith.constant 0 : i32
    %2 = arith.cmpi ne, %1, %c0_i32_0 : i32
    scf.if %2 {
      %cst = arith.constant 0.000000e+00 : f32
      %12 = vector.broadcast %cst : f32 to vector<128x128xf32>
      %c0 = arith.constant 0 : index
      %c0_4 = arith.constant 0 : index
      %13 = vector.load %arg9[%c0, %c0_4] : memref<128x128xf32, #tpu.memory_space<vmem>>, vector<128x128xf32>
      tpu.vector_store %arg9[%c0, %c0_4], %12 {strides = array<i32>} : memref<128x128xf32, #tpu.memory_space<vmem>>, vector<128x128xf32>,
    } else {
    }
    %3 = arith.index_cast %arg0 : i32 to index
    %4 = arith.index_cast %arg1 : i32 to index
    %5 = memref.load %arg2[%3, %4] : memref<2x2xi32, #tpu.memory_space<smem>>
    %c0_i32_1 = arith.constant 0 : i32
    %6 = arith.cmpi sgt, %5, %c0_i32_1 : i32
    %7 = arith.extui %6 : i1 to i32
    %c0_i32_2 = arith.constant 0 : i32
    %8 = arith.cmpi ne, %7, %c0_i32_2 : i32
    scf.if %8 {
      %c0 = arith.constant 0 : index
      %c0_4 = arith.constant 0 : index
      %12 = vector.load %arg9[%c0, %c0_4] : memref<128x128xf32, #tpu.memory_space<vmem>>, vector<128x128xf32>
      %c0_5 = arith.constant 0 : index
      %c0_6 = arith.constant 0 : index
      %13 = vector.load %arg4[%c0_5, %c0_6] : memref<128x128xbf16, #tpu.memory_space<vmem>>, vector<128x128xbf16>
      %c0_7 = arith.constant 0 : index
      %c0_8 = arith.constant 0 : index
      %14 = vector.load %arg5[%c0_7, %c0_8] : memref<128x128xbf16, #tpu.memory_space<vmem>>, vector<128x128xbf16>
      %cst = arith.constant dense<0.000000e+00> : vector<128x128xf32>
      %15 = tpu.matmul %13, %14, %cst {dimension_numbers = #tpu.dot_dimension_numbers<[1], [0], [0], [1], [0, 0, 1, 1], [], []>} : vector<128x128xbf16>, vector<128x128xbf16>, vector<128x128xf32> -> vector<128x128xf32>
      %16 = arith.addf %12, %15 : vector<128x128xf32>
      %c0_9 = arith.constant 0 : index
      %c0_10 = arith.constant 0 : index
      %17 = vector.load %arg9[%c0_9, %c0_10] : memref<128x128xf32, #tpu.memory_space<vmem>>, vector<128x128xf32>
      tpu.vector_store %arg9[%c0_9, %c0_10], %16 {strides = array<i32>} : memref<128x128xf32, #tpu.memory_space<vmem>>, vector<128x128xf32>,
    } else {
    }
    %c1_i32 = arith.constant 1 : i32
    %9 = arith.cmpi eq, %arg1, %c1_i32 : i32
    %10 = arith.extui %9 : i1 to i32
    %c0_i32_3 = arith.constant 0 : i32
    %11 = arith.cmpi ne, %10, %c0_i32_3 : i32
    scf.if %11 {
      %c0 = arith.constant 0 : index
      %c0_4 = arith.constant 0 : index
      %12 = vector.load %arg9[%c0, %c0_4] : memref<128x128xf32, #tpu.memory_space<vmem>>, vector<128x128xf32>
      %13 = arith.truncf %12 : vector<128x128xf32> to vector<128x128xbf16>
      %c0_5 = arith.constant 0 : index
      %c0_6 = arith.constant 0 : index
      %14 = vector.load %arg7[%c0_5, %c0_6] : memref<128x128xbf16, #tpu.memory_space<vmem>>, vector<128x128xbf16>
      %cst = arith.constant dense<0.000000e+00> : vector<128x128xf32>
      %15 = tpu.matmul %13, %14, %cst {dimension_numbers = #tpu.dot_dimension_numbers<[1], [0], [0], [1], [0, 0, 1, 1], [], []>} : vector<128x128xbf16>, vector<128x128xbf16>, vector<128x128xf32> -> vector<128x128xf32>
      %c0_7 = arith.constant 0 : index
      %c0_8 = arith.constant 0 : index
      %16 = vector.load %arg6[%c0_7, %c0_8] : memref<128x128xf32, #tpu.memory_space<vmem>>, vector<128x128xf32>
      %17 = arith.addf %15, %16 : vector<128x128xf32>
      %c0_9 = arith.constant 0 : index
      %c0_10 = arith.constant 0 : index
      %18 = vector.load %arg8[%c0_9, %c0_10] : memref<128x128xf32, #tpu.memory_space<vmem>>, vector<128x128xf32>
      tpu.vector_store %arg8[%c0_9, %c0_10], %17 {strides = array<i32>} : memref<128x128xf32, #tpu.memory_space<vmem>>, vector<128x128xf32>,
    } else {
    }
    return
  }
  func.func @transform_0(%arg0: i32, %arg1: i32, %arg2: memref<2x2xi32, #tpu.memory_space<smem>>, %arg3: memref<2x2xi32, #tpu.memory_space<smem>>) -> (i32, i32) {
    %0 = arith.index_cast %arg0 : i32 to index
    %1 = arith.index_cast %arg1 : i32 to index
    %2 = memref.load %arg3[%0, %1] : memref<2x2xi32, #tpu.memory_space<smem>>
    %c0_i32 = arith.constant 0 : i32
    return %arg0, %2 : i32, i32
  }
  func.func @transform_1(%arg0: i32, %arg1: i32, %arg2: memref<2x2xi32, #tpu.memory_space<smem>>, %arg3: memref<2x2xi32, #tpu.memory_space<smem>>) -> (i32, i32) {
    %0 = arith.index_cast %arg0 : i32 to index
    %1 = arith.index_cast %arg1 : i32 to index
    %2 = memref.load %arg3[%0, %1] : memref<2x2xi32, #tpu.memory_space<smem>>
    %c0_i32 = arith.constant 0 : i32
    %c0_i32_0 = arith.constant 0 : i32
    return %2, %c0_i32 : i32, i32
  }
  func.func @transform_2(%arg0: i32, %arg1: i32, %arg2: memref<2x2xi32, #tpu.memory_space<smem>>, %arg3: memref<2x2xi32, #tpu.memory_space<smem>>) -> (i32, i32) {
    %c0_i32 = arith.constant 0 : i32
    %c0_i32_0 = arith.constant 0 : i32
    return %arg0, %c0_i32 : i32, i32
  }
  func.func @transform_3(%arg0: i32, %arg1: i32, %arg2: memref<2x2xi32, #tpu.memory_space<smem>>, %arg3: memref<2x2xi32, #tpu.memory_space<smem>>) -> (i32, i32) {
    %c0_i32 = arith.constant 0 : i32
    %c0_i32_0 = arith.constant 0 : i32
    %c0_i32_1 = arith.constant 0 : i32
    return %c0_i32, %c0_i32_0 : i32, i32
  }
  func.func @transform_4(%arg0: i32, %arg1: i32, %arg2: memref<2x2xi32, #tpu.memory_space<smem>>, %arg3: memref<2x2xi32, #tpu.memory_space<smem>>) -> (i32, i32) {
    %c0_i32 = arith.constant 0 : i32
    %c0_i32_0 = arith.constant 0 : i32
    return %arg0, %c0_i32 : i32, i32
  }
}

</mosaic_0001>

<llo_original>
// kernel: tpu_custom_call.1
$region0: #{tpu_custom_call.1}
  #allocation0 [shape = 'u32[]', space=smem, size = 0x4, offset = 0x4, fixed_abs, tag = 'smem constant byte address 0x4 - core index']
  #allocation1 [shape = 'u32[72,128]{1,0:T(1,128)}', space=vmem, size = 0x9000, scoped, tag = 'internal scratch']
  #allocation2 [shape = 'f32[128,128]{1,0:T(8,128)}', space=vmem, size = 0x10000, scoped, tag = 'scratch operand']
  #allocation3 [shape = 's32[1]{0}', space=sflag, size = 0x4, scoped, tag = 'scoped memory for tpu_custom_call.1']
  #allocation4 [shape = 'u8[1024]{0}', space=smem, size = 0x400, scoped, tag = 'prefetched SMEM operand 0']
  #allocation5 [shape = 'u8[1024]{0}', space=smem, size = 0x400, scoped, tag = 'prefetched SMEM operand 1']
  %s0 = inlined_call_operand.hbm [shape: s32[2,2], index: 0, kind: input, shape index: {}]
  %s1 = inlined_call_operand.hbm [shape: s32[2,2], index: 1, kind: input, shape index: {}]
  %s2 = inlined_call_operand.hbm [shape: bf16[256,256], index: 2, kind: input, shape index: {}]
  %s3 = inlined_call_operand.hbm [shape: bf16[256,128], index: 3, kind: input, shape index: {}]
  %s4 = inlined_call_operand.hbm [shape: f32[256,128], index: 4, kind: input, shape index: {}]
  %s5 = inlined_call_operand.hbm [shape: bf16[128,128], index: 5, kind: input, shape index: {}]
  %s6 = inlined_call_operand.hbm [shape: f32[256,128], index: 6, kind: output, shape index: {}]
  %s7 = sld [smem:[#allocation0]]
  $region77: #{tpu_custom_call.1} parent=0
    _
  %s9 = ssub.s32 1, %s7
  %s10 = scalar_select 0, %s9, %s7
  %s12 = sshll.u32 %s0, 4
  %s13 = int_to_ptr.hbm [resolvable:$true] %s12
  %15 = dma.hbm_to_smem %s13, 32, [#allocation4], [#allocation3]
  %s17 = sshll.u32 %s1, 4
  %s18 = int_to_ptr.hbm [resolvable:$true] %s17
  %20 = dma.hbm_to_smem %s18, 32, [#allocation5], [#allocation3]
  %22 = dma.done [#allocation3], 64
  %23 = sfence
  $region1: #{tpu_custom_call.1} parent=0
    #allocation6 [shape = 'u8[65536]{0}', space=vmem, size = 0x10000, scoped, tag = 'input window, operand 2']
    #allocation7 [shape = 's32[2]{0}', space=sflag, size = 0x8, scoped, tag = 'scoped memory for tpu_custom_call.1']
    #allocation8 [shape = 's32[2]{0}', space=sflag, size = 0x8, scoped, tag = 'scoped memory for tpu_custom_call.1']
    #allocation9 [shape = 'u8[65536]{0}', space=vmem, size = 0x10000, scoped, tag = 'input window, operand 3']
    #allocation10 [shape = 's32[2]{0}', space=sflag, size = 0x8, scoped, tag = 'scoped memory for tpu_custom_call.1']
    #allocation11 [shape = 'u8[131072]{0}', space=vmem, size = 0x20000, scoped, tag = 'input window, operand 4']
    #allocation12 [shape = 'u8[32768]{0}', space=vmem, size = 0x8000, scoped, tag = 'input window, operand 5, single buffered']
    #allocation13 [shape = 's32[1]{0}', space=sflag, size = 0x4, scoped, tag = 'scoped memory for tpu_custom_call.1']
    #allocation14 [shape = 'u8[131072]{0}', space=vmem, size = 0x20000, scoped, tag = 'output window, operand 0']
    %24 = vsyncpa [#allocation7], 0
    %s25 = scalar_lea.sflag [#allocation7], 1
    %26 = vsyncpa %s25, 0
    %27 = vsyncpa [#allocation10], 0
    %s28 = scalar_lea.sflag [#allocation10], 1
    %29 = vsyncpa %s28, 0
    %30 = vsyncpa [#allocation13], 0
    %31 = vsyncpa [#allocation8], 0
    %s32 = scalar_lea.sflag [#allocation8], 1
    %33 = vsyncpa %s32, 0
    loop: start=0, step=1, limit=6
    $region2: #{tpu_custom_call.1} parent=1 // loop_pre_header
      _
    $region3: #{tpu_custom_call.1} parent=1 // loop_header
      %s35 = sphi 0, %s39
      %p36 = scmp.ge.s32.totalorder %s35, 6
      %s42 = sphi 0, %s54
      %s43 = sphi 0, %s50
      %s44 = sphi 0, %s42
      %s45 = sphi 0, %s43
      %s46 = sphi 0, %s44
      %s47 = sphi 0, %s45
      %s75 = sphi 0, %s77
      %s78 = sphi 0, %s75
      %s79 = sphi 0, %s78
      %s95 = sphi 0, %s79
      %s117 = sphi 0, %s119
      %s120 = sphi 0, %s117
      %s121 = sphi 0, %s120
      %s137 = sphi 0, %s121
      %s143 = sphi 0, %s145
      %s146 = sphi 0, %s143
      %s147 = sphi 0, %s146
      %s163 = sphi 0, %s147
      %s167 = sphi 0, %s167
      %s169 = sphi 0, %s167
      %s170 = sphi 0, %s169
      %s184 = sphi 0, %s170
      %s190 = sphi 0, %s192
      %s193 = sphi 0, %s190
      %s194 = sphi 0, %s193
      %s210 = sphi 0, %s194
    $region4: #{tpu_custom_call.1} parent=1 // loop_header_branch
      %38 = sbr.rel (%p36) target = $region8
    $region5: #{tpu_custom_call.1} parent=1 // loop_body
      %s40 = ssub.s32 %s35, 1
      %s41 = ssub.s32 %s35, 2
      %s48 = sadd.s32 1, %s43
      %p49 = scmp.ge.s32.totalorder %s48, 2
      %s50 = scalar_select %p49, 0, %s48
      %s51 = sadd.s32 1, %s42
      %s52 = scalar_select %p49, %s51, %s42
      %p53 = scmp.ge.s32.totalorder %s52, 2
      %s54 = scalar_select %p53, 0, %s52
      %s55 = sshra.s32 %s43, 7
      %s56 = sand.u32 %s43, 127
      %s57 = sadd.s32 %s55, %s42
      %s58 = smul.u32 %s57, 128
      %s59 = sshra.s32 %s43, 7
      %s60 = sand.u32 %s43, 127
      %s61 = sadd.s32 %s58, %s60
      %s62 = sld [smem:[#allocation5 + %s61]]
      %s63 = sshra.s32 %s50, 7
      %s64 = sand.u32 %s50, 127
      %s65 = sadd.s32 %s63, %s54
      %s66 = smul.u32 %s65, 128
      %s67 = sshra.s32 %s50, 7
      %s68 = sand.u32 %s50, 127
      %s69 = sadd.s32 %s66, %s68
      %s70 = sld [smem:[#allocation5 + %s69]]
      %s71 = ssub.s32 %s42, %s54
      %s72 = ssub.s32 %s62, %s70
      %s73 = sor.u32 %s71, %s72
      %p74 = scmp.eq.s32.totalorder %s73, 0
      %s76 = sadd.s32 %s75, 1
      %s77 = scalar_select %p74, %s75, %s76
      %p80 = pneg %p74
      %p81 = scmp.eq.s32.totalorder %s35, 3
      %p82 = por %p80, %p81
      %p83 = scmp.ne.s32.totalorder %s75, %s78
      %p84 = scmp.eq.s32.totalorder %s35, 0
      %p85 = por %p83, %p84
      %p86 = scmp.ne.s32.totalorder %s75, %s78
      %p87 = scmp.eq.s32.totalorder %s40, 3
      %p88 = por %p86, %p87
      %p89 = scmp.ne.s32.totalorder %s78, %s79
      %p90 = scmp.eq.s32.totalorder %s40, 0
      %p91 = por %p89, %p90
      %p92 = scmp.ne.s32.totalorder %s78, %s79
      %p93 = scmp.eq.s32.totalorder %s41, 3
      %p94 = por %p92, %p93
      %p96 = scmp.ne.s32.totalorder %s79, %s95
      %p97 = scmp.eq.s32.totalorder %s41, 0
      %p98 = por %p96, %p97
      %s99 = sshra.s32 %s43, 7
      %s100 = sand.u32 %s43, 127
      %s101 = sadd.s32 %s99, %s42
      %s102 = smul.u32 %s101, 128
      %s103 = sshra.s32 %s43, 7
      %s104 = sand.u32 %s43, 127
      %s105 = sadd.s32 %s102, %s104
      %s106 = sld [smem:[#allocation5 + %s105]]
      %s107 = sshra.s32 %s50, 7
      %s108 = sand.u32 %s50, 127
      %s109 = sadd.s32 %s107, %s54
      %s110 = smul.u32 %s109, 128
      %s111 = sshra.s32 %s50, 7
      %s112 = sand.u32 %s50, 127
      %s113 = sadd.s32 %s110, %s112
      %s114 = sld [smem:[#allocation5 + %s113]]
      %s115 = ssub.s32 %s106, %s114
      %p116 = scmp.eq.s32.totalorder %s115, 0
      %s118 = sadd.s32 %s117, 1
      %s119 = scalar_select %p116, %s117, %s118
      %p122 = pneg %p116
      %p123 = scmp.eq.s32.totalorder %s35, 3
      %p124 = por %p122, %p123
      %p125 = scmp.ne.s32.totalorder %s117, %s120
      %p126 = scmp.eq.s32.totalorder %s35, 0
      %p127 = por %p125, %p126
      %p128 = scmp.ne.s32.totalorder %s117, %s120
      %p129 = scmp.eq.s32.totalorder %s40, 3
      %p130 = por %p128, %p129
      %p131 = scmp.ne.s32.totalorder %s120, %s121
      %p132 = scmp.eq.s32.totalorder %s40, 0
      %p133 = por %p131, %p132
      %p134 = scmp.ne.s32.totalorder %s120, %s121
      %p135 = scmp.eq.s32.totalorder %s41, 3
      %p136 = por %p134, %p135
      %p138 = scmp.ne.s32.totalorder %s121, %s137
      %p139 = scmp.eq.s32.totalorder %s41, 0
      %p140 = por %p138, %p139
      %s141 = ssub.s32 %s42, %s54
      %p142 = scmp.eq.s32.totalorder %s141, 0
      %s144 = sadd.s32 %s143, 1
      %s145 = scalar_select %p142, %s143, %s144
      %p148 = pneg %p142
      %p149 = scmp.eq.s32.totalorder %s35, 3
      %p150 = por %p148, %p149
      %p151 = scmp.ne.s32.totalorder %s143, %s146
      %p152 = scmp.eq.s32.totalorder %s35, 0
      %p153 = por %p151, %p152
      %p154 = scmp.ne.s32.totalorder %s143, %s146
      %p155 = scmp.eq.s32.totalorder %s40, 3
      %p156 = por %p154, %p155
      %p157 = scmp.ne.s32.totalorder %s146, %s147
      %p158 = scmp.eq.s32.totalorder %s40, 0
      %p159 = por %p157, %p158
      %p160 = scmp.ne.s32.totalorder %s146, %s147
      %p161 = scmp.eq.s32.totalorder %s41, 3
      %p162 = por %p160, %p161
      %p164 = scmp.ne.s32.totalorder %s147, %s163
      %p165 = scmp.eq.s32.totalorder %s41, 0
      %p166 = por %p164, %p165
      %s168 = sadd.s32 %s167, 1
      %p171 = scmp.eq.s32.totalorder %s35, 3
      %p172 = scmp.ne.s32.totalorder %s167, %s169
      %p173 = scmp.eq.s32.totalorder %s35, 0
      %p174 = por %p172, %p173
      %p175 = scmp.ne.s32.totalorder %s167, %s169
      %p176 = scmp.eq.s32.totalorder %s40, 3
      %p177 = por %p175, %p176
      %p178 = scmp.ne.s32.totalorder %s169, %s170
      %p179 = scmp.eq.s32.totalorder %s40, 0
      %p180 = por %p178, %p179
      %p181 = scmp.ne.s32.totalorder %s169, %s170
      %p182 = scmp.eq.s32.totalorder %s41, 3
      %p183 = por %p181, %p182
      %p185 = scmp.ne.s32.totalorder %s170, %s184
      %p186 = scmp.eq.s32.totalorder %s41, 0
      %p187 = por %p185, %p186
      %s188 = ssub.s32 %s42, %s54
      %p189 = scmp.eq.s32.totalorder %s188, 0
      %s191 = sadd.s32 %s190, 1
      %s192 = scalar_select %p189, %s190, %s191
      %p195 = pneg %p189
      %p196 = scmp.eq.s32.totalorder %s35, 3
      %p197 = por %p195, %p196
      %p198 = scmp.ne.s32.totalorder %s190, %s193
      %p199 = scmp.eq.s32.totalorder %s35, 0
      %p200 = por %p198, %p199
      %p201 = scmp.ne.s32.totalorder %s190, %s193
      %p202 = scmp.eq.s32.totalorder %s40, 3
      %p203 = por %p201, %p202
      %p204 = scmp.ne.s32.totalorder %s193, %s194
      %p205 = scmp.eq.s32.totalorder %s40, 0
      %p206 = por %p204, %p205
      %p207 = scmp.ne.s32.totalorder %s193, %s194
      %p208 = scmp.eq.s32.totalorder %s41, 3
      %p209 = por %p207, %p208
      %p211 = scmp.ne.s32.totalorder %s194, %s210
      %p212 = scmp.eq.s32.totalorder %s41, 0
      %p213 = por %p211, %p212
      %p214 = scmp.le.s32.totalorder 1, %s35
      %p215 = scmp.lt.s32.totalorder %s35, 5
      %p216 = pnand %p214, %p215
      %p217 = pneg %p216
      // Predicated region
      $region9: #{tpu_custom_call.1} parent=5 // pred_check
        _
      $region10: #{tpu_custom_call.1} parent=5 // pred_check_branch
        %219 = sbr.rel (%p216) target = $region12
      $region11: #{tpu_custom_call.1} parent=5 // pred_region
        %s220 = ssub.s32 %s35, 1
        // Predicated region
        $region13: #{tpu_custom_call.1} parent=11 // pred_check
          %p221 = pneg %p180
        $region14: #{tpu_custom_call.1} parent=11 // pred_check_branch
          %223 = sbr.rel (%p221) target = $region16
        $region15: #{tpu_custom_call.1} parent=11 // pred_region
          %225 = vsyncadd [#allocation13], 0
          %s226 = sshll.u32 %s5, 4
          %s227 = int_to_ptr.hbm [resolvable:$true] %s226
          %s228 = sshll.u32 [#allocation12], 4
          %s229 = int_to_ptr.vmem [resolvable:$true] %s228
          %234 = dma.hbm_to_vmem [thread:$0]  %s227, 1024, %s229, [#allocation13], 64, 64, 4
        $region16: #{tpu_custom_call.1} parent=11 // pred_fallthru
          _
      $region12: #{tpu_custom_call.1} parent=5 // pred_fallthru
        _
      %p235 = scmp.lt.s32.totalorder %s35, 4
      // Predicated region
      $region17: #{tpu_custom_call.1} parent=5 // pred_check
        %p236 = pneg %p235
      $region18: #{tpu_custom_call.1} parent=5 // pred_check_branch
        %238 = sbr.rel (%p236) target = $region20
      $region19: #{tpu_custom_call.1} parent=5 // pred_region
        // Predicated region
        $region21: #{tpu_custom_call.1} parent=19 // pred_check
          %p239 = pneg %p85
        $region22: #{tpu_custom_call.1} parent=19 // pred_check_branch
          %241 = sbr.rel (%p239) target = $region24
        $region23: #{tpu_custom_call.1} parent=19 // pred_region
          %s242 = sand.u32 %s75, 1
          %s243 = scalar_lea.sflag [#allocation7], %s242
          %s244 = sand.u32 %s75, 1
          %s245 = smul.addr %s244, 64
          %s246 = scalar_lea.vmem [#allocation6], %s245
          %s247 = sshra.s32 %s43, 7
          %s248 = sand.u32 %s43, 127
          %s249 = sadd.s32 %s247, %s42
          %s250 = smul.u32 %s249, 128
          %s251 = sshra.s32 %s43, 7
          %s252 = sand.u32 %s43, 127
          %s253 = sadd.s32 %s250, %s252
          %s254 = sld [smem:[#allocation5 + %s253]]
          %s255 = smul.u32 16, %s42
          %257 = vsyncadd %s243, 0
          %s258 = smul.addr %s255, 2
          %s259 = sadd.s32 %s254, %s258
          %s260 = smul.addr %s259, 4
          %s261 = scalar_lea.hbm %s2, %s260
          %s262 = sshll.u32 %s261, 4
          %s263 = int_to_ptr.hbm [resolvable:$true] %s262
          %s264 = sshll.u32 %s246, 4
          %s265 = int_to_ptr.vmem [resolvable:$true] %s264
          %270 = dma.hbm_to_vmem [thread:$0]  %s263, 1024, %s265, %s243, 128, 64, 4
        $region24: #{tpu_custom_call.1} parent=19 // pred_fallthru
          _
        // Predicated region
        $region25: #{tpu_custom_call.1} parent=19 // pred_check
          %p271 = pneg %p127
        $region26: #{tpu_custom_call.1} parent=19 // pred_check_branch
          %273 = sbr.rel (%p271) target = $region28
        $region27: #{tpu_custom_call.1} parent=19 // pred_region
          %s274 = sand.u32 %s35, 1
          %s275 = scalar_lea.sflag [#allocation10], %s274
          %s276 = sand.u32 %s117, 1
          %s277 = smul.addr %s276, 64
          %s278 = scalar_lea.vmem [#allocation9], %s277
          %s279 = sshra.s32 %s43, 7
          %s280 = sand.u32 %s43, 127
          %s281 = sadd.s32 %s279, %s42
          %s282 = smul.u32 %s281, 128
          %s283 = sshra.s32 %s43, 7
          %s284 = sand.u32 %s43, 127
          %s285 = sadd.s32 %s282, %s284
          %s286 = sld [smem:[#allocation5 + %s285]]
          %s287 = smul.u32 16, %s286
          %289 = vsyncadd %s275, 0
          %s290 = smul.addr %s287, 4
          %s291 = scalar_lea.hbm %s3, %s290
          %s292 = sshll.u32 %s291, 4
          %s293 = int_to_ptr.hbm [resolvable:$true] %s292
          %s294 = sshll.u32 %s278, 4
          %s295 = int_to_ptr.vmem [resolvable:$true] %s294
          %300 = dma.hbm_to_vmem [thread:$0]  %s293, 1024, %s295, %s275, 64, 64, 4
        $region28: #{tpu_custom_call.1} parent=19 // pred_fallthru
          _
        // Predicated region
        $region29: #{tpu_custom_call.1} parent=19 // pred_check
          %p301 = pneg %p153
        $region30: #{tpu_custom_call.1} parent=19 // pred_check_branch
          %303 = sbr.rel (%p301) target = $region32
        $region31: #{tpu_custom_call.1} parent=19 // pred_region
          %s304 = sand.u32 %s35, 1
          %s305 = scalar_lea.sflag [#allocation10], %s304
          %s306 = sand.u32 %s143, 1
          %s307 = smul.addr %s306, 128
          %s308 = scalar_lea.vmem [#allocation11], %s307
          %s309 = smul.u32 16, %s42
          %311 = vsyncadd %s305, 0
          %s312 = smul.addr %s309, 8
          %s313 = scalar_lea.hbm %s4, %s312
          %s314 = sshll.u32 %s313, 4
          %s315 = int_to_ptr.hbm [resolvable:$true] %s314
          %s316 = sshll.u32 %s308, 4
          %s317 = int_to_ptr.vmem [resolvable:$true] %s316
          %322 = dma.hbm_to_vmem [thread:$0]  %s315, 2048, %s317, %s305, 128, 128, 8
        $region32: #{tpu_custom_call.1} parent=19 // pred_fallthru
          _
      $region20: #{tpu_custom_call.1} parent=5 // pred_fallthru
        _
      %p323 = scmp.le.s32.totalorder 1, %s35
      %p324 = scmp.lt.s32.totalorder %s35, 5
      %p325 = pnand %p323, %p324
      %p326 = pneg %p325
      // Predicated region
      $region33: #{tpu_custom_call.1} parent=5 // pred_check
        _
      $region34: #{tpu_custom_call.1} parent=5 // pred_check_branch
        %328 = sbr.rel (%p325) target = $region36
      $region35: #{tpu_custom_call.1} parent=5 // pred_region
        %s329 = ssub.s32 %s35, 1
        %s330 = sand.u32 %s78, 1
        %s331 = scalar_lea.sflag [#allocation7], %s330
        %s332 = sand.u32 %s78, 1
        %s333 = smul.addr %s332, 64
        %s334 = scalar_lea.vmem [#allocation6], %s333
        // Predicated region
        $region37: #{tpu_custom_call.1} parent=35 // pred_check
          %p335 = pneg %p91
        $region38: #{tpu_custom_call.1} parent=35 // pred_check_branch
          %337 = sbr.rel (%p335) target = $region40
        $region39: #{tpu_custom_call.1} parent=35 // pred_region
          %339 = dma.done %s331, 1024
        $region40: #{tpu_custom_call.1} parent=35 // pred_fallthru
          _
        %s340 = sand.u32 %s40, 1
        %s341 = scalar_lea.sflag [#allocation10], %s340
        %s342 = sand.u32 %s120, 1
        %s343 = smul.addr %s342, 64
        %s344 = scalar_lea.vmem [#allocation9], %s343
        // Predicated region
        $region41: #{tpu_custom_call.1} parent=35 // pred_check
          %p345 = pneg %p133
        $region42: #{tpu_custom_call.1} parent=35 // pred_check_branch
          %347 = sbr.rel (%p345) target = $region44
        $region43: #{tpu_custom_call.1} parent=35 // pred_region
          %349 = dma.done %s341, 1024
        $region44: #{tpu_custom_call.1} parent=35 // pred_fallthru
          _
        %s350 = sand.u32 %s40, 1
        %s351 = scalar_lea.sflag [#allocation10], %s350
        %s352 = sand.u32 %s146, 1
        %s353 = smul.addr %s352, 128
        %s354 = scalar_lea.vmem [#allocation11], %s353
        // Predicated region
        $region45: #{tpu_custom_call.1} parent=35 // pred_check
          %p355 = pneg %p159
        $region46: #{tpu_custom_call.1} parent=35 // pred_check_branch
          %357 = sbr.rel (%p355) target = $region48
        $region47: #{tpu_custom_call.1} parent=35 // pred_region
          %359 = dma.done %s351, 2048
        $region48: #{tpu_custom_call.1} parent=35 // pred_fallthru
          _
        // Predicated region
        $region49: #{tpu_custom_call.1} parent=35 // pred_check
          %p360 = pneg %p180
        $region50: #{tpu_custom_call.1} parent=35 // pred_check_branch
          %362 = sbr.rel (%p360) target = $region52
        $region51: #{tpu_custom_call.1} parent=35 // pred_region
          %364 = dma.done [#allocation13], 1024
        $region52: #{tpu_custom_call.1} parent=35 // pred_fallthru
          _
        %s365 = sand.u32 %s78, 1
        %s366 = scalar_lea.sflag [#allocation7], %s365
        %s367 = sand.u32 %s78, 1
        %s368 = smul.addr %s367, 64
        %s369 = scalar_lea.vmem [#allocation6], %s368
        %p370 = pneg %p91
        %p371 = pneg %p88
        %s372 = sand.u32 %s40, 1
        %s373 = scalar_lea.sflag [#allocation10], %s372
        %s374 = sand.u32 %s120, 1
        %s375 = smul.addr %s374, 64
        %s376 = scalar_lea.vmem [#allocation9], %s375
        %p377 = pneg %p133
        %p378 = pneg %p130
        %s379 = sand.u32 %s40, 1
        %s380 = scalar_lea.sflag [#allocation10], %s379
        %s381 = sand.u32 %s146, 1
        %s382 = smul.addr %s381, 128
        %s383 = scalar_lea.vmem [#allocation11], %s382
        %p384 = pneg %p159
        %p385 = pneg %p156
        %p386 = pneg %p180
        %p387 = pneg %p177
        %p388 = pneg %p206
        %p389 = pneg %p203
        %s390 = sand.u32 %s193, 1
        %s391 = scalar_lea.sflag [#allocation8], %s390
        %s392 = sand.u32 %s193, 1
        %s393 = smul.addr %s392, 128
        %s394 = scalar_lea.vmem [#allocation14], %s393
        %s395 = sshra.s32 %s45, 7
        %s396 = sand.u32 %s45, 127
        %s397 = sadd.s32 %s395, %s44
        %s398 = smul.u32 %s397, 128
        %s399 = sshra.s32 %s45, 7
        %s400 = sand.u32 %s45, 127
        %s401 = sadd.s32 %s398, %s400
        %s402 = sld [smem:[#allocation5 + %s401]]
        %s403 = smul.u32 16, %s44
        %s404 = sshra.s32 %s45, 7
        %s405 = sand.u32 %s45, 127
        %s406 = sadd.s32 %s404, %s44
        %s407 = smul.u32 %s406, 128
        %s408 = sshra.s32 %s45, 7
        %s409 = sand.u32 %s45, 127
        %s410 = sadd.s32 %s407, %s409
        %s411 = sld [smem:[#allocation5 + %s410]]
        %s412 = smul.u32 16, %s411
        %s413 = smul.u32 16, %s44
        %s414 = smul.u32 16, %s44
        %p415 = scmp.eq.s32.totalorder %s45, 0
        // Predicated region
        $region53: #{tpu_custom_call.1} parent=35 // pred_check
          %p416 = pneg %p415
        $region54: #{tpu_custom_call.1} parent=35 // pred_check_branch
          %418 = sbr.rel (%p416) target = $region56
        $region55: #{tpu_custom_call.1} parent=35 // pred_region
          %419 = vst [vmem:[#allocation2] sm:$0xff] 0.0
          %420 = vst [vmem:[#allocation2 + $0x8] sm:$0xff] 0.0
          %421 = vst [vmem:[#allocation2 + $0x10] sm:$0xff] 0.0
          %422 = vst [vmem:[#allocation2 + $0x18] sm:$0xff] 0.0
          %423 = vst [vmem:[#allocation2 + $0x20] sm:$0xff] 0.0
          %424 = vst [vmem:[#allocation2 + $0x28] sm:$0xff] 0.0
          %425 = vst [vmem:[#allocation2 + $0x30] sm:$0xff] 0.0
          %426 = vst [vmem:[#allocation2 + $0x38] sm:$0xff] 0.0
          %427 = vst [vmem:[#allocation2 + $0x40] sm:$0xff] 0.0
          %428 = vst [vmem:[#allocation2 + $0x48] sm:$0xff] 0.0
          %429 = vst [vmem:[#allocation2 + $0x50] sm:$0xff] 0.0
          %430 = vst [vmem:[#allocation2 + $0x58] sm:$0xff] 0.0
          %431 = vst [vmem:[#allocation2 + $0x60] sm:$0xff] 0.0
          %432 = vst [vmem:[#allocation2 + $0x68] sm:$0xff] 0.0
          %433 = vst [vmem:[#allocation2 + $0x70] sm:$0xff] 0.0
          %434 = vst [vmem:[#allocation2 + $0x78] sm:$0xff] 0.0
        $region56: #{tpu_custom_call.1} parent=35 // pred_fallthru
          _
        %s435 = sshra.s32 %s45, 7
        %s436 = sand.u32 %s45, 127
        %s437 = sadd.s32 %s435, %s44
        %s438 = smul.u32 %s437, 128
        %s439 = sshra.s32 %s45, 7
        %s440 = sand.u32 %s45, 127
        %s441 = sadd.s32 %s438, %s440
        %s442 = sld [smem:[#allocation4 + %s441]]
        %p443 = scmp.gt.s32.totalorder %s442, 0
        // Predicated region
        $region57: #{tpu_custom_call.1} parent=35 // pred_check
          %p444 = pneg %p443
        $region58: #{tpu_custom_call.1} parent=35 // pred_check_branch
          %446 = sbr.rel (%p444) target = $region60
        $region59: #{tpu_custom_call.1} parent=35 // pred_region
          %v447 = vld [vmem:[#allocation2] sm:$0xff]
          %v448 = vld [vmem:[#allocation2 + $0x8] sm:$0xff]
          %v449 = vld [vmem:[#allocation2 + $0x10] sm:$0xff]
          %v450 = vld [vmem:[#allocation2 + $0x18] sm:$0xff]
          %v451 = vld [vmem:[#allocation2 + $0x20] sm:$0xff]
          %v452 = vld [vmem:[#allocation2 + $0x28] sm:$0xff]
          %v453 = vld [vmem:[#allocation2 + $0x30] sm:$0xff]
          %v454 = vld [vmem:[#allocation2 + $0x38] sm:$0xff]
          %v455 = vld [vmem:[#allocation2 + $0x40] sm:$0xff]
          %v456 = vld [vmem:[#allocation2 + $0x48] sm:$0xff]
          %v457 = vld [vmem:[#allocation2 + $0x50] sm:$0xff]
          %v458 = vld [vmem:[#allocation2 + $0x58] sm:$0xff]
          %v459 = vld [vmem:[#allocation2 + $0x60] sm:$0xff]
          %v460 = vld [vmem:[#allocation2 + $0x68] sm:$0xff]
          %v461 = vld [vmem:[#allocation2 + $0x70] sm:$0xff]
          %v462 = vld [vmem:[#allocation2 + $0x78] sm:$0xff]
          %v463 = vld [vmem:[%s334] sm:$0xf]
          %v464 = vld [vmem:[%s334 + $0x4] sm:$0xf]
          %v465 = vld [vmem:[%s334 + $0x8] sm:$0xf]
          %v466 = vld [vmem:[%s334 + $0xc] sm:$0xf]
          %v467 = vld [vmem:[%s334 + $0x10] sm:$0xf]
          %v468 = vld [vmem:[%s334 + $0x14] sm:$0xf]
          %v469 = vld [vmem:[%s334 + $0x18] sm:$0xf]
          %v470 = vld [vmem:[%s334 + $0x1c] sm:$0xf]
          %v471 = vld [vmem:[%s334 + $0x20] sm:$0xf]
          %v472 = vld [vmem:[%s334 + $0x24] sm:$0xf]
          %v473 = vld [vmem:[%s334 + $0x28] sm:$0xf]
          %v474 = vld [vmem:[%s334 + $0x2c] sm:$0xf]
          %v475 = vld [vmem:[%s334 + $0x30] sm:$0xf]
          %v476 = vld [vmem:[%s334 + $0x34] sm:$0xf]
          %v477 = vld [vmem:[%s334 + $0x38] sm:$0xf]
          %v478 = vld [vmem:[%s334 + $0x3c] sm:$0xf]
          %v479 = vld [vmem:[%s344] sm:$0xf]
          %v480 = vld [vmem:[%s344 + $0x4] sm:$0xf]
          %v481 = vld [vmem:[%s344 + $0x8] sm:$0xf]
          %v482 = vld [vmem:[%s344 + $0xc] sm:$0xf]
          %v483 = vld [vmem:[%s344 + $0x10] sm:$0xf]
          %v484 = vld [vmem:[%s344 + $0x14] sm:$0xf]
          %v485 = vld [vmem:[%s344 + $0x18] sm:$0xf]
          %v486 = vld [vmem:[%s344 + $0x1c] sm:$0xf]
          %v487 = vld [vmem:[%s344 + $0x20] sm:$0xf]
          %v488 = vld [vmem:[%s344 + $0x24] sm:$0xf]
          %v489 = vld [vmem:[%s344 + $0x28] sm:$0xf]
          %v490 = vld [vmem:[%s344 + $0x2c] sm:$0xf]
          %v491 = vld [vmem:[%s344 + $0x30] sm:$0xf]
          %v492 = vld [vmem:[%s344 + $0x34] sm:$0xf]
          %v493 = vld [vmem:[%s344 + $0x38] sm:$0xf]
          %v494 = vld [vmem:[%s344 + $0x3c] sm:$0xf]
          %v511 = vunpack.c.l.b16 %v463
          %v512 = vunpack.c.l.b16 %v464
          %v513 = vunpack.c.l.b16 %v465
          %v514 = vunpack.c.l.b16 %v466
          %v515 = vunpack.c.l.b16 %v467
          %v516 = vunpack.c.l.b16 %v468
          %v517 = vunpack.c.l.b16 %v469
          %v518 = vunpack.c.l.b16 %v470
          %v519 = vunpack.c.l.b16 %v471
          %v520 = vunpack.c.l.b16 %v472
          %v521 = vunpack.c.l.b16 %v473
          %v522 = vunpack.c.l.b16 %v474
          %v523 = vunpack.c.l.b16 %v475
          %v524 = vunpack.c.l.b16 %v476
          %v525 = vunpack.c.l.b16 %v477
          %v526 = vunpack.c.l.b16 %v478
          %v527 = vpack.c.b16 %v512, %v511
          %v528 = vpack.c.b16 %v514, %v513
          %v529 = vpack.c.b16 %v516, %v515
          %v530 = vpack.c.b16 %v518, %v517
          %v531 = vpack.c.b16 %v520, %v519
          %v532 = vpack.c.b16 %v522, %v521
          %v533 = vpack.c.b16 %v524, %v523
          %v534 = vpack.c.b16 %v526, %v525
          %v559 = vunpack.c.l.b16 %v479
          %v560 = vunpack.c.l.b16 %v480
          %v561 = vunpack.c.l.b16 %v481
          %v562 = vunpack.c.l.b16 %v482
          %v563 = vunpack.c.l.b16 %v483
          %v564 = vunpack.c.l.b16 %v484
          %v565 = vunpack.c.l.b16 %v485
          %v566 = vunpack.c.l.b16 %v486
          %v567 = vunpack.c.l.b16 %v487
          %v568 = vunpack.c.l.b16 %v488
          %v569 = vunpack.c.l.b16 %v489
          %v570 = vunpack.c.l.b16 %v490
          %v571 = vunpack.c.l.b16 %v491
          %v572 = vunpack.c.l.b16 %v492
          %v573 = vunpack.c.l.b16 %v493
          %v574 = vunpack.c.l.b16 %v494
          %v575 = vpack.c.b16 %v560, %v559
          %v576 = vpack.c.b16 %v562, %v561
          %v577 = vpack.c.b16 %v564, %v563
          %v578 = vpack.c.b16 %v566, %v565
          %v579 = vpack.c.b16 %v568, %v567
          %v580 = vpack.c.b16 %v570, %v569
          %v581 = vpack.c.b16 %v572, %v571
          %v582 = vpack.c.b16 %v574, %v573
          %591 = vmatpush.bf16.msra.mxu0 %v582
          %592 = vmatpush.bf16.msra.mxu0 %v581
          %593 = vmatpush.bf16.msra.mxu0 %v580
          %594 = vmatpush.bf16.msra.mxu0 %v579
          %595 = vmatpush.bf16.msra.mxu0 %v578
          %596 = vmatpush.bf16.msra.mxu0 %v577
          %597 = vmatpush.bf16.msra.mxu0 %v576
          %598 = vmatpush.bf16.msra.mxu0 %v575
          %599 = vmatmul.bf16.gmra.mxu0 %v527
          %v600 = vpop.f32.mrf.mxu0
          %v601 = vadd.f32 0.0, %v600
          %v602 = vpop.f32.mrf.mxu0
          %v603 = vadd.f32 0.0, %v602
          %604 = vmatmul.bf16.gmra.mxu0 %v528
          %v605 = vpop.f32.mrf.mxu0
          %v606 = vadd.f32 0.0, %v605
          %v607 = vpop.f32.mrf.mxu0
          %v608 = vadd.f32 0.0, %v607
          %609 = vmatmul.bf16.gmra.mxu0 %v529
          %v610 = vpop.f32.mrf.mxu0
          %v611 = vadd.f32 0.0, %v610
          %v612 = vpop.f32.mrf.mxu0
          %v613 = vadd.f32 0.0, %v612
          %614 = vmatmul.bf16.gmra.mxu0 %v530
          %v615 = vpop.f32.mrf.mxu0
          %v616 = vadd.f32 0.0, %v615
          %v617 = vpop.f32.mrf.mxu0
          %v618 = vadd.f32 0.0, %v617
          %619 = vmatmul.bf16.gmra.mxu0 %v531
          %v620 = vpop.f32.mrf.mxu0
          %v621 = vadd.f32 0.0, %v620
          %v622 = vpop.f32.mrf.mxu0
          %v623 = vadd.f32 0.0, %v622
          %624 = vmatmul.bf16.gmra.mxu0 %v532
          %v625 = vpop.f32.mrf.mxu0
          %v626 = vadd.f32 0.0, %v625
          %v627 = vpop.f32.mrf.mxu0
          %v628 = vadd.f32 0.0, %v627
          %629 = vmatmul.bf16.gmra.mxu0 %v533
          %v630 = vpop.f32.mrf.mxu0
          %v631 = vadd.f32 0.0, %v630
          %v632 = vpop.f32.mrf.mxu0
          %v633 = vadd.f32 0.0, %v632
          %634 = vmatmul.bf16.gmra.mxu0 %v534
          %v635 = vpop.f32.mrf.mxu0
          %v636 = vadd.f32 0.0, %v635
          %v637 = vpop.f32.mrf.mxu0
          %v638 = vadd.f32 0.0, %v637
          %639 = vdwg.mxu0
          %v640 = vadd.f32 %v447, %v601
          %v641 = vadd.f32 %v448, %v603
          %v642 = vadd.f32 %v449, %v606
          %v643 = vadd.f32 %v450, %v608
          %v644 = vadd.f32 %v451, %v611
          %v645 = vadd.f32 %v452, %v613
          %v646 = vadd.f32 %v453, %v616
          %v647 = vadd.f32 %v454, %v618
          %v648 = vadd.f32 %v455, %v621
          %v649 = vadd.f32 %v456, %v623
          %v650 = vadd.f32 %v457, %v626
          %v651 = vadd.f32 %v458, %v628
          %v652 = vadd.f32 %v459, %v631
          %v653 = vadd.f32 %v460, %v633
          %v654 = vadd.f32 %v461, %v636
          %v655 = vadd.f32 %v462, %v638
          %656 = vst [vmem:[#allocation2] sm:$0xff] %v640
          %657 = vst [vmem:[#allocation2 + $0x8] sm:$0xff] %v641
          %658 = vst [vmem:[#allocation2 + $0x10] sm:$0xff] %v642
          %659 = vst [vmem:[#allocation2 + $0x18] sm:$0xff] %v643
          %660 = vst [vmem:[#allocation2 + $0x20] sm:$0xff] %v644
          %661 = vst [vmem:[#allocation2 + $0x28] sm:$0xff] %v645
          %662 = vst [vmem:[#allocation2 + $0x30] sm:$0xff] %v646
          %663 = vst [vmem:[#allocation2 + $0x38] sm:$0xff] %v647
          %664 = vst [vmem:[#allocation2 + $0x40] sm:$0xff] %v648
          %665 = vst [vmem:[#allocation2 + $0x48] sm:$0xff] %v649
          %666 = vst [vmem:[#allocation2 + $0x50] sm:$0xff] %v650
          %667 = vst [vmem:[#allocation2 + $0x58] sm:$0xff] %v651
          %668 = vst [vmem:[#allocation2 + $0x60] sm:$0xff] %v652
          %669 = vst [vmem:[#allocation2 + $0x68] sm:$0xff] %v653
          %670 = vst [vmem:[#allocation2 + $0x70] sm:$0xff] %v654
          %671 = vst [vmem:[#allocation2 + $0x78] sm:$0xff] %v655
        $region60: #{tpu_custom_call.1} parent=35 // pred_fallthru
          _
        %p672 = scmp.eq.s32.totalorder %s45, 1
        // Predicated region
        $region61: #{tpu_custom_call.1} parent=35 // pred_check
          %p673 = pneg %p672
        $region62: #{tpu_custom_call.1} parent=35 // pred_check_branch
          %675 = sbr.rel (%p673) target = $region64
        $region63: #{tpu_custom_call.1} parent=35 // pred_region
          %v676 = vld [vmem:[#allocation2] sm:$0xff]
          %v677 = vld [vmem:[#allocation2 + $0x8] sm:$0xff]
          %v678 = vld [vmem:[#allocation2 + $0x10] sm:$0xff]
          %v679 = vld [vmem:[#allocation2 + $0x18] sm:$0xff]
          %v680 = vld [vmem:[#allocation2 + $0x20] sm:$0xff]
          %v681 = vld [vmem:[#allocation2 + $0x28] sm:$0xff]
          %v682 = vld [vmem:[#allocation2 + $0x30] sm:$0xff]
          %v683 = vld [vmem:[#allocation2 + $0x38] sm:$0xff]
          %v684 = vld [vmem:[#allocation2 + $0x40] sm:$0xff]
          %v685 = vld [vmem:[#allocation2 + $0x48] sm:$0xff]
          %v686 = vld [vmem:[#allocation2 + $0x50] sm:$0xff]
          %v687 = vld [vmem:[#allocation2 + $0x58] sm:$0xff]
          %v688 = vld [vmem:[#allocation2 + $0x60] sm:$0xff]
          %v689 = vld [vmem:[#allocation2 + $0x68] sm:$0xff]
          %v690 = vld [vmem:[#allocation2 + $0x70] sm:$0xff]
          %v691 = vld [vmem:[#allocation2 + $0x78] sm:$0xff]
          %v692 = vpack.c.bf16 %v677, %v676
          %v693 = vpack.c.bf16 %v679, %v678
          %v694 = vpack.c.bf16 %v681, %v680
          %v695 = vpack.c.bf16 %v683, %v682
          %v696 = vpack.c.bf16 %v685, %v684
          %v697 = vpack.c.bf16 %v687, %v686
          %v698 = vpack.c.bf16 %v689, %v688
          %v699 = vpack.c.bf16 %v691, %v690
          %v700 = vld [vmem:[#allocation12] sm:$0xf]
          %v701 = vld [vmem:[#allocation12 + $0x4] sm:$0xf]
          %v702 = vld [vmem:[#allocation12 + $0x8] sm:$0xf]
          %v703 = vld [vmem:[#allocation12 + $0xc] sm:$0xf]
          %v704 = vld [vmem:[#allocation12 + $0x10] sm:$0xf]
          %v705 = vld [vmem:[#allocation12 + $0x14] sm:$0xf]
          %v706 = vld [vmem:[#allocation12 + $0x18] sm:$0xf]
          %v707 = vld [vmem:[#allocation12 + $0x1c] sm:$0xf]
          %v708 = vld [vmem:[#allocation12 + $0x20] sm:$0xf]
          %v709 = vld [vmem:[#allocation12 + $0x24] sm:$0xf]
          %v710 = vld [vmem:[#allocation12 + $0x28] sm:$0xf]
          %v711 = vld [vmem:[#allocation12 + $0x2c] sm:$0xf]
          %v712 = vld [vmem:[#allocation12 + $0x30] sm:$0xf]
          %v713 = vld [vmem:[#allocation12 + $0x34] sm:$0xf]
          %v714 = vld [vmem:[#allocation12 + $0x38] sm:$0xf]
          %v715 = vld [vmem:[#allocation12 + $0x3c] sm:$0xf]
          %v716 = vld [vmem:[%s354] sm:$0xff]
          %v717 = vld [vmem:[%s354 + $0x8] sm:$0xff]
          %v718 = vld [vmem:[%s354 + $0x10] sm:$0xff]
          %v719 = vld [vmem:[%s354 + $0x18] sm:$0xff]
          %v720 = vld [vmem:[%s354 + $0x20] sm:$0xff]
          %v721 = vld [vmem:[%s354 + $0x28] sm:$0xff]
          %v722 = vld [vmem:[%s354 + $0x30] sm:$0xff]
          %v723 = vld [vmem:[%s354 + $0x38] sm:$0xff]
          %v724 = vld [vmem:[%s354 + $0x40] sm:$0xff]
          %v725 = vld [vmem:[%s354 + $0x48] sm:$0xff]
          %v726 = vld [vmem:[%s354 + $0x50] sm:$0xff]
          %v727 = vld [vmem:[%s354 + $0x58] sm:$0xff]
          %v728 = vld [vmem:[%s354 + $0x60] sm:$0xff]
          %v729 = vld [vmem:[%s354 + $0x68] sm:$0xff]
          %v730 = vld [vmem:[%s354 + $0x70] sm:$0xff]
          %v731 = vld [vmem:[%s354 + $0x78] sm:$0xff]
          %v748 = vunpack.c.l.b16 %v700
          %v749 = vunpack.c.l.b16 %v701
          %v750 = vunpack.c.l.b16 %v702
          %v751 = vunpack.c.l.b16 %v703
          %v752 = vunpack.c.l.b16 %v704
          %v753 = vunpack.c.l.b16 %v705
          %v754 = vunpack.c.l.b16 %v706
          %v755 = vunpack.c.l.b16 %v707
          %v756 = vunpack.c.l.b16 %v708
          %v757 = vunpack.c.l.b16 %v709
          %v758 = vunpack.c.l.b16 %v710
          %v759 = vunpack.c.l.b16 %v711
          %v760 = vunpack.c.l.b16 %v712
          %v761 = vunpack.c.l.b16 %v713
          %v762 = vunpack.c.l.b16 %v714
          %v763 = vunpack.c.l.b16 %v715
          %v764 = vpack.c.b16 %v749, %v748
          %v765 = vpack.c.b16 %v751, %v750
          %v766 = vpack.c.b16 %v753, %v752
          %v767 = vpack.c.b16 %v755, %v754
          %v768 = vpack.c.b16 %v757, %v756
          %v769 = vpack.c.b16 %v759, %v758
          %v770 = vpack.c.b16 %v761, %v760
          %v771 = vpack.c.b16 %v763, %v762
          %780 = vmatpush.bf16.msra.mxu0 %v771
          %781 = vmatpush.bf16.msra.mxu0 %v770
          %782 = vmatpush.bf16.msra.mxu0 %v769
          %783 = vmatpush.bf16.msra.mxu0 %v768
          %784 = vmatpush.bf16.msra.mxu0 %v767
          %785 = vmatpush.bf16.msra.mxu0 %v766
          %786 = vmatpush.bf16.msra.mxu0 %v765
          %787 = vmatpush.bf16.msra.mxu0 %v764
          %788 = vmatmul.bf16.gmra.mxu0 %v692
          %v789 = vpop.f32.mrf.mxu0
          %v790 = vadd.f32 %v716, %v789
          %v791 = vpop.f32.mrf.mxu0
          %v792 = vadd.f32 %v717, %v791
          %793 = vmatmul.bf16.gmra.mxu0 %v693
          %v794 = vpop.f32.mrf.mxu0
          %v795 = vadd.f32 %v718, %v794
          %v796 = vpop.f32.mrf.mxu0
          %v797 = vadd.f32 %v719, %v796
          %798 = vmatmul.bf16.gmra.mxu0 %v694
          %v799 = vpop.f32.mrf.mxu0
          %v800 = vadd.f32 %v720, %v799
          %v801 = vpop.f32.mrf.mxu0
          %v802 = vadd.f32 %v721, %v801
          %803 = vmatmul.bf16.gmra.mxu0 %v695
          %v804 = vpop.f32.mrf.mxu0
          %v805 = vadd.f32 %v722, %v804
          %v806 = vpop.f32.mrf.mxu0
          %v807 = vadd.f32 %v723, %v806
          %808 = vmatmul.bf16.gmra.mxu0 %v696
          %v809 = vpop.f32.mrf.mxu0
          %v810 = vadd.f32 %v724, %v809
          %v811 = vpop.f32.mrf.mxu0
          %v812 = vadd.f32 %v725, %v811
          %813 = vmatmul.bf16.gmra.mxu0 %v697
          %v814 = vpop.f32.mrf.mxu0
          %v815 = vadd.f32 %v726, %v814
          %v816 = vpop.f32.mrf.mxu0
          %v817 = vadd.f32 %v727, %v816
          %818 = vmatmul.bf16.gmra.mxu0 %v698
          %v819 = vpop.f32.mrf.mxu0
          %v820 = vadd.f32 %v728, %v819
          %v821 = vpop.f32.mrf.mxu0
          %v822 = vadd.f32 %v729, %v821
          %823 = vmatmul.bf16.gmra.mxu0 %v699
          %v824 = vpop.f32.mrf.mxu0
          %v825 = vadd.f32 %v730, %v824
          %v826 = vpop.f32.mrf.mxu0
          %v827 = vadd.f32 %v731, %v826
          %828 = vdwg.mxu0
          %829 = vst [vmem:[%s394] sm:$0xff] %v790
          %830 = vst [vmem:[%s394 + $0x8] sm:$0xff] %v792
          %831 = vst [vmem:[%s394 + $0x10] sm:$0xff] %v795
          %832 = vst [vmem:[%s394 + $0x18] sm:$0xff] %v797
          %833 = vst [vmem:[%s394 + $0x20] sm:$0xff] %v800
          %834 = vst [vmem:[%s394 + $0x28] sm:$0xff] %v802
          %835 = vst [vmem:[%s394 + $0x30] sm:$0xff] %v805
          %836 = vst [vmem:[%s394 + $0x38] sm:$0xff] %v807
          %837 = vst [vmem:[%s394 + $0x40] sm:$0xff] %v810
          %838 = vst [vmem:[%s394 + $0x48] sm:$0xff] %v812
          %839 = vst [vmem:[%s394 + $0x50] sm:$0xff] %v815
          %840 = vst [vmem:[%s394 + $0x58] sm:$0xff] %v817
          %841 = vst [vmem:[%s394 + $0x60] sm:$0xff] %v820
          %842 = vst [vmem:[%s394 + $0x68] sm:$0xff] %v822
          %843 = vst [vmem:[%s394 + $0x70] sm:$0xff] %v825
          %844 = vst [vmem:[%s394 + $0x78] sm:$0xff] %v827
        $region64: #{tpu_custom_call.1} parent=35 // pred_fallthru
          _
        %s845 = sand.u32 %s193, 1
        %s846 = scalar_lea.sflag [#allocation8], %s845
        %s847 = sand.u32 %s193, 1
        %s848 = smul.addr %s847, 128
        %s849 = scalar_lea.vmem [#allocation14], %s848
        // Predicated region
        $region65: #{tpu_custom_call.1} parent=35 // pred_check
          %p850 = pneg %p203
        $region66: #{tpu_custom_call.1} parent=35 // pred_check_branch
          %852 = sbr.rel (%p850) target = $region68
        $region67: #{tpu_custom_call.1} parent=35 // pred_region
          %s853 = smul.u32 16, %s44
          %855 = vsyncadd %s846, 0
          %s856 = smul.addr %s853, 8
          %s857 = scalar_lea.hbm %s6, %s856
          %s858 = sshll.u32 %s849, 4
          %s859 = int_to_ptr.vmem [resolvable:$true] %s858
          %s860 = sshll.u32 %s857, 4
          %s861 = int_to_ptr.hbm [resolvable:$true] %s860
          %866 = dma.vmem_to_hbm [thread:$0]  %s859, 2048, %s861, %s846, 128, 128, 8
        $region68: #{tpu_custom_call.1} parent=35 // pred_fallthru
          _
      $region36: #{tpu_custom_call.1} parent=5 // pred_fallthru
        _
      %p867 = scmp.le.s32.totalorder 2, %s35
      // Predicated region
      $region69: #{tpu_custom_call.1} parent=5 // pred_check
        %p868 = pneg %p867
      $region70: #{tpu_custom_call.1} parent=5 // pred_check_branch
        %870 = sbr.rel (%p868) target = $region72
      $region71: #{tpu_custom_call.1} parent=5 // pred_region
        %s871 = ssub.s32 %s35, 2
        // Predicated region
        $region73: #{tpu_custom_call.1} parent=71 // pred_check
          %p872 = pneg %p209
        $region74: #{tpu_custom_call.1} parent=71 // pred_check_branch
          %874 = sbr.rel (%p872) target = $region76
        $region75: #{tpu_custom_call.1} parent=71 // pred_region
          %s875 = sand.u32 %s194, 1
          %s876 = scalar_lea.sflag [#allocation8], %s875
          %s877 = sand.u32 %s194, 1
          %s878 = smul.addr %s877, 128
          %s879 = scalar_lea.vmem [#allocation14], %s878
          %881 = dma.done %s876, 2048
        $region76: #{tpu_custom_call.1} parent=71 // pred_fallthru
          _
      $region72: #{tpu_custom_call.1} parent=5 // pred_fallthru
        _
    $region6: #{tpu_custom_call.1} parent=1 // loop_footer
      %s39 = sadd.s32 1, %s35
    $region7: #{tpu_custom_call.1} parent=1 // loop_footer_branch
      %34 = sbr.rel target = $region3
    $region8: #{tpu_custom_call.1} parent=1 // loop_exit
      _
    %882 = vsyncpa [#allocation7], 1
    %s883 = scalar_lea.sflag [#allocation7], 1
    %884 = vsyncpa %s883, 1
    %885 = vsyncpa [#allocation10], 1
    %s886 = scalar_lea.sflag [#allocation10], 1
    %887 = vsyncpa %s886, 1
    %888 = vsyncpa [#allocation13], 1
    %889 = vsyncpa [#allocation8], 1
    %s890 = scalar_lea.sflag [#allocation8], 1
    %891 = vsyncpa %s890, 1

</llo_original>
